<compile_context>
chip_gen: v7x
topology: tpu7x:2x2x1
jax: 0.10.0
libtpu: 0.0.40
codegen_flags: <defaults>
</compile_context>

<pallas_src>
import functools
import math

import jax
import jax.numpy as jnp
from jax.experimental import pallas as pl
from jax.experimental.pallas import tpu as pltpu


def _round_up(x, m):
    return ((x + m - 1) // m) * m


# ---------------------------------------------------------------------------
# Kernel: one (tm, K) tile of patches  @  resident (K, E) weight, + f32 bias.
# ---------------------------------------------------------------------------
def _patch_embed_matmul_kernel(p_ref, w_ref, b_ref, o_ref):
    # p_ref: (tm, K) streamed patch tile (compute dtype, e.g. bf16)
    # w_ref: (K, E)  resident projection weight (compute dtype)
    # b_ref: (1, E)  f32 bias; o_ref: (tm, E) output tile
    acc = jnp.dot(p_ref[...], w_ref[...], preferred_element_type=jnp.float32)
    o_ref[...] = (acc + b_ref[...]).astype(o_ref.dtype)


# ---------------------------------------------------------------------------
# One-time parameter prep (call at init/load time, NOT per step).
# ---------------------------------------------------------------------------
def prepare_patch_embedding_params(weight, bias, compute_dtype=jnp.bfloat16):
    """(E, C, ph, pw) conv weight -> (K, E) matmul weight in compute_dtype + (1, E) f32 bias."""
    E, C, ph, pw = weight.shape
    K = C * ph * pw
    w = weight.reshape(E, K).T.astype(compute_dtype)   # transpose happens exactly once
    b = bias.astype(jnp.float32).reshape(1, E)
    return w, b


# ---------------------------------------------------------------------------
# Wrapper-side im2col (fed to the kernel as a (M, K) matrix).
# ---------------------------------------------------------------------------
def _extract_patches(x, patch_size, stride):
    """NCHW image -> (B*num_patches, C*ph*pw) im2col matrix (column order C, ph, pw).
    Call with x already in the compute dtype so the intermediate is half-width."""
    ph, pw = patch_size
    sh, sw = stride
    B, C, H, W = x.shape
    nh = (H - ph) // sh + 1
    nw = (W - pw) // sw + 1
    if (sh, sw) == (ph, pw):
        # gather-free fast path for non-overlapping patches (the common ViT case)
        xc = x[:, :, : nh * ph, : nw * pw]
        xg = xc.reshape(B, C, nh, ph, nw, pw)
    else:
        # general (possibly overlapping) stride: gather rows then cols
        h_idx = (jnp.arange(nh) * sh)[:, None] + jnp.arange(ph)[None, :]   # (nh, ph)
        w_idx = (jnp.arange(nw) * sw)[:, None] + jnp.arange(pw)[None, :]   # (nw, pw)
        xg = x[:, :, h_idx, :][:, :, :, :, w_idx]                          # (B, C, nh, ph, nw, pw)
    xg = jnp.transpose(xg, (0, 2, 4, 1, 3, 5))                             # (B, nh, nw, C, ph, pw)
    return xg.reshape(B * nh * nw, C * ph * pw), nh * nw


# ---------------------------------------------------------------------------
# Generation-aware tiling.
# ---------------------------------------------------------------------------
def _tpu_vmem_and_multicore():
    """(vmem_capacity_bytes, has_multiple_tensorcores) with conservative fallbacks."""
    vmem = 64 * 1024 * 1024                                # smallest per-TC VMEM (v7x)
    try:
        vmem = int(pltpu.get_tpu_info().vmem_capacity_bytes)
    except Exception:
        pass
    multi_tc = False
    try:
        kind = jax.devices()[0].device_kind.lower()
        # v4 megacore and v7x expose 2 TensorCores per device; v5e/v6e have 1.
        multi_tc = ("v4" in kind) or ("v7" in kind) or ("7x" in kind)
    except Exception:
        pass
    return vmem, multi_tc


def _choose_tm(M, K, E, in_bytes, out_bytes, vmem_budget, multi_tc):
    """Largest row tile whose double-buffered footprint fits the budget.
    Candidates >= 16 (bf16 sublane tile); >=256 candidates are multiples of 256 for the
    2x256^2 MXUs on v6e/v7x (v5e's 4x128^2 packs 128-tiles fine)."""
    if M <= 16:
        return max(M, 1)                                   # full-dim exemption from (8,128)
    fixed = 2 * (K * E * in_bytes + E * 4)                 # resident weight + bias (2x buffered)
    tm = 16
    for cand in (4096, 2048, 1024, 512, 256, 128, 64, 32, 16):
        if cand > M:
            continue
        stream = 2 * cand * (K * in_bytes + E * out_bytes) # patch + out tiles, double buffered
        if fixed + stream <= vmem_budget:
            tm = cand
            break
    # Only multi-TensorCore chips benefit from forcing >= 2 grid steps.
    if multi_tc and pl.cdiv(M, tm) < 2:
        tm = max(16, _round_up(tm // 2, 16))
    return tm


# ---------------------------------------------------------------------------
# Forward: Conv2d(kernel=patch, stride) + flatten(2).transpose(1, 2).
# ---------------------------------------------------------------------------
def patch_embedding_forward(x, w_ke, bias2d, *, patch_size, stride=None,
                            compute_dtype=jnp.bfloat16, out_dtype=None):
    """x: (B, C, H, W).  w_ke/bias2d from prepare_patch_embedding_params.
    Returns (B, num_patches, embed_dim).  Set out_dtype=jnp.bfloat16 to halve output HBM
    traffic; default preserves the module semantics (same dtype as x)."""
    ph, pw = patch_size
    stride = patch_size if stride is None else stride
    B, C, H, W = x.shape
    K, E = w_ke.shape
    out_dtype = x.dtype if out_dtype is None else out_dtype

    # Cast BEFORE the im2col so the transposed HBM intermediate is in the compute dtype.
    patches, N = _extract_patches(x.astype(compute_dtype), (ph, pw), stride)   # (M, K)
    M = B * N

    in_bytes = jnp.dtype(compute_dtype).itemsize
    out_bytes = jnp.dtype(out_dtype).itemsize
    vmem_cap, multi_tc = _tpu_vmem_and_multicore()
    tm = _choose_tm(M, K, E, in_bytes, out_bytes, int(0.65 * vmem_cap), multi_tc)
    grid = (pl.cdiv(M, tm),)

    cost = pl.CostEstimate(
        flops=2 * M * K * E,
        transcendentals=0,
        bytes_accessed=M * K * in_bytes + K * E * in_bytes + E * 4 + M * E * out_bytes,
    )

    out2d = pl.pallas_call(
        _patch_embed_matmul_kernel,
        out_shape=jax.ShapeDtypeStruct((M, E), out_dtype),
        grid_spec=pltpu.PrefetchScalarGridSpec(
            num_scalar_prefetch=0,
            grid=grid,
            in_specs=[
                pl.BlockSpec((tm, K), lambda i: (i, 0)),   # streamed patch rows
                pl.BlockSpec((K, E), lambda i: (0, 0)),    # resident projection weight
                pl.BlockSpec((1, E), lambda i: (0, 0)),    # resident bias
            ],
            out_specs=pl.BlockSpec((tm, E), lambda i: (i, 0)),
        ),
        compiler_params=pltpu.CompilerParams(
            dimension_semantics=("parallel",),
            vmem_limit_bytes=int(0.85 * vmem_cap),
        ),
        cost_estimate=cost,
    )(patches, w_ke, bias2d)

    return out2d.reshape(B, N, E)


def init_patch_embedding_params(key, in_channels, embed_dim, patch_size):
    """Deterministic init mirroring nn.Conv2d defaults (kaiming_uniform a=sqrt(5))."""
    ph, pw = patch_size
    fan_in = in_channels * ph * pw
    bound = 1.0 / math.sqrt(fan_in)
    k_w, k_b = jax.random.split(key)
    weight = jax.random.uniform(
        k_w, (embed_dim, in_channels, ph, pw), jnp.float32, -bound, bound)
    bias = jax.random.uniform(k_b, (embed_dim,), jnp.float32, -bound, bound)
    return weight, bias


if __name__ == "__main__":
    # Small shapes consistent with the module: img=16, patch=4 -> 16 patches per image
    B, C, IMG, PATCH, EMBED = 2, 4, 16, 4, 32
    key = jax.random.PRNGKey(0)
    k_x, k_p = jax.random.split(key)

    x = jax.random.normal(k_x, (B, C, IMG, IMG), jnp.float32)
    weight, bias = init_patch_embedding_params(k_p, C, EMBED, (PATCH, PATCH))

    w_ke, b2d = prepare_patch_embedding_params(weight, bias)   # one-time weight prep
    fwd = jax.jit(functools.partial(
        patch_embedding_forward, patch_size=(PATCH, PATCH)))
    out = jax.block_until_ready(fwd(x, w_ke, b2d))

    # Reference: Conv2d(kernel=stride=patch) + bias, then flatten(2).transpose(1, 2),
    # computed from the same bf16-rounded operands the kernel feeds the MXU.
    x_r = x.astype(jnp.bfloat16).astype(jnp.float32)
    w_r = weight.astype(jnp.bfloat16).astype(jnp.float32)
    ref = jax.lax.conv_general_dilated(
        x_r, w_r, window_strides=(PATCH, PATCH), padding="VALID",
        dimension_numbers=("NCHW", "OIHW", "NCHW"),
        precision=jax.lax.Precision.HIGHEST,
    ) + bias[None, :, None, None]
    ref = ref.reshape(B, EMBED, -1).transpose(0, 2, 1)

    assert out.shape == (B, (IMG // PATCH) ** 2, EMBED), out.shape
    assert jnp.allclose(out, ref, atol=1e-2, rtol=1e-2), float(jnp.max(jnp.abs(out - ref)))

    print("KERNEL_OK")
</pallas_src>

<mosaic_0001>
module attributes {stable_mosaic.version = 11 : i64} {
  func.func @_patch_embed_matmul_kernel(%arg0: i32, %arg1: memref<32x64xbf16, #tpu.memory_space<vmem>>, %arg2: memref<64x32xbf16, #tpu.memory_space<vmem>>, %arg3: memref<1x32xf32, #tpu.memory_space<vmem>>, %arg4: memref<32x32xf32, #tpu.memory_space<vmem>>) attributes {dimension_semantics = [#tpu.dimension_semantics<parallel>], iteration_bounds = array<i64: 1>, scalar_prefetch = 0 : i64, scratch_operands = 0 : i64, tpu.core_type = #tpu.core_type<tc>, window_params = [{transform_indices = @transform_0, window_bounds = array<i64: 32, 64>}, {pipeline_mode = #tpu.pipeline_mode<synchronous>, transform_indices = @transform_1, window_bounds = array<i64: 64, 32>}, {pipeline_mode = #tpu.pipeline_mode<synchronous>, transform_indices = @transform_2, window_bounds = array<i64: 1, 32>}, {transform_indices = @transform_3, window_bounds = array<i64: 32, 32>}]} {
    %c0 = arith.constant 0 : index
    %c0_0 = arith.constant 0 : index
    %0 = vector.load %arg1[%c0, %c0_0] : memref<32x64xbf16, #tpu.memory_space<vmem>>, vector<32x64xbf16>
    %c0_1 = arith.constant 0 : index
    %c0_2 = arith.constant 0 : index
    %1 = vector.load %arg2[%c0_1, %c0_2] : memref<64x32xbf16, #tpu.memory_space<vmem>>, vector<64x32xbf16>
    %cst = arith.constant dense<0.000000e+00> : vector<32x32xf32>
    %2 = tpu.matmul %0, %1, %cst {dimension_numbers = #tpu.dot_dimension_numbers<[1], [0], [0], [1], [0, 0, 1, 1], [], []>} : vector<32x64xbf16>, vector<64x32xbf16>, vector<32x32xf32> -> vector<32x32xf32>
    %c0_3 = arith.constant 0 : index
    %c0_4 = arith.constant 0 : index
    %3 = vector.load %arg3[%c0_3, %c0_4] : memref<1x32xf32, #tpu.memory_space<vmem>>, vector<1x32xf32>
    %4 = vector.broadcast %3 : vector<1x32xf32> to vector<32x32xf32>
    %5 = arith.addf %2, %4 : vector<32x32xf32>
    %c0_5 = arith.constant 0 : index
    %c0_6 = arith.constant 0 : index
    %6 = vector.load %arg4[%c0_5, %c0_6] : memref<32x32xf32, #tpu.memory_space<vmem>>, vector<32x32xf32>
    tpu.vector_store %arg4[%c0_5, %c0_6], %5 {strides = array<i32>} : memref<32x32xf32, #tpu.memory_space<vmem>>, vector<32x32xf32>,
    return
  }
  func.func @transform_0(%arg0: i32) -> (i32, i32) {
    %c0_i32 = arith.constant 0 : i32
    %c0_i32_0 = arith.constant 0 : i32
    return %arg0, %c0_i32 : i32, i32
  }
  func.func @transform_1(%arg0: i32) -> (i32, i32) {
    %c0_i32 = arith.constant 0 : i32
    %c0_i32_0 = arith.constant 0 : i32
    %c0_i32_1 = arith.constant 0 : i32
    return %c0_i32, %c0_i32_0 : i32, i32
  }
  func.func @transform_2(%arg0: i32) -> (i32, i32) {
    %c0_i32 = arith.constant 0 : i32
    %c0_i32_0 = arith.constant 0 : i32
    %c0_i32_1 = arith.constant 0 : i32
    return %c0_i32, %c0_i32_0 : i32, i32
  }
  func.func @transform_3(%arg0: i32) -> (i32, i32) {
    %c0_i32 = arith.constant 0 : i32
    %c0_i32_0 = arith.constant 0 : i32
    return %arg0, %c0_i32 : i32, i32
  }
}

</mosaic_0001>

<llo_original>
// kernel: patch_embedding_forward.1
$region0: #{patch_embedding_forward.1}
  #allocation0 [shape = 'u32[]', space=smem, size = 0x4, offset = 0x4, fixed_abs, tag = 'smem constant byte address 0x4 - core index']
  #allocation1 [shape = 'u32[144,128]{1,0:T(1,128)}', space=vmem, size = 0x12000, scoped, tag = 'internal scratch']
  %s0 = inlined_call_operand.vmem [shape: bf16[32,64], index: 0, kind: input, shape index: {}]
  %s1 = inlined_call_operand.vmem [shape: bf16[64,32], index: 1, kind: input, shape index: {}]
  %s2 = inlined_call_operand.vmem [shape: f32[1,32], index: 2, kind: input, shape index: {}]
  %s3 = inlined_call_operand.hbm [shape: f32[32,32], index: 3, kind: output, shape index: {}]
  %s4 = sld [smem:[#allocation0]]
  $region22: #{patch_embedding_forward.1} parent=0
    _
  %s6 = ssub.s32 1, %s4
  %s7 = scalar_select 0, %s6, %s4
  $region1: #{patch_embedding_forward.1} parent=0
    #allocation2 [shape = 'u8[16384]{0}', space=vmem, size = 0x4000, scoped, tag = 'output window, operand 0, single buffered']
    #allocation3 [shape = 's32[1]{0}', space=sflag, size = 0x4, scoped, tag = 'scoped memory for patch_embedding_forward.1']
    %8 = vsyncpa [#allocation3], 0
    // Predicated region
    $region2: #{patch_embedding_forward.1} parent=1 // pred_check
      _
    $region3: #{patch_embedding_forward.1} parent=1 // pred_check_branch
      %10 = sbr.rel (0) target = $region5
    $region4: #{patch_embedding_forward.1} parent=1 // pred_region
      _
    $region5: #{patch_embedding_forward.1} parent=1 // pred_fallthru
      _
    // Predicated region
    $region6: #{patch_embedding_forward.1} parent=1 // pred_check
      _
    $region7: #{patch_embedding_forward.1} parent=1 // pred_check_branch
      %12 = sbr.rel (0) target = $region9
    $region8: #{patch_embedding_forward.1} parent=1 // pred_region
      _
    $region9: #{patch_embedding_forward.1} parent=1 // pred_fallthru
      _
    // Predicated region
    $region10: #{patch_embedding_forward.1} parent=1 // pred_check
      _
    $region11: #{patch_embedding_forward.1} parent=1 // pred_check_branch
      %14 = sbr.rel (0) target = $region13
    $region12: #{patch_embedding_forward.1} parent=1 // pred_region
      _
    $region13: #{patch_embedding_forward.1} parent=1 // pred_fallthru
      _
    %v16 = vld [vmem:[%s0] sm:$0xf]
    %v17 = vld [vmem:[%s0 + $0x4] sm:$0xf]
    %v18 = vld [vmem:[%s0 + $0x8] sm:$0xf]
    %v19 = vld [vmem:[%s0 + $0xc] sm:$0xf]
    %v20 = vld [vmem:[%s1] sm:$0xf]
    %v21 = vld [vmem:[%s1 + $0x4] sm:$0xf]
    %v22 = vld [vmem:[%s1 + $0x8] sm:$0xf]
    %v23 = vld [vmem:[%s1 + $0xc] sm:$0xf]
    %v24 = vld [vmem:[%s1 + $0x10] sm:$0xf]
    %v25 = vld [vmem:[%s1 + $0x14] sm:$0xf]
    %v26 = vld [vmem:[%s1 + $0x18] sm:$0xf]
    %v27 = vld [vmem:[%s1 + $0x1c] sm:$0xf]
    %v28 = vld [vmem:[%s2] sm:$0x1]
    %v30 = vlaneseq
    %v31 = vshrl.u32 %v30, 7
    %v32 = vsub.s32 0, %v31
    %v33 = vrot.slane %v28, %v32
    %v39 = vunpack.c.l.b16 %v16
    %v40 = vunpack.c.l.b16 %v17
    %v41 = vunpack.c.l.b16 %v18
    %v42 = vunpack.c.l.b16 %v19
    %v43 = vpack.c.b16 %v40, %v39
    %v44 = vpack.c.b16 %v42, %v41
    %v53 = vunpack.c.l.b16 %v20
    %v54 = vunpack.c.l.b16 %v21
    %v55 = vunpack.c.l.b16 %v22
    %v56 = vunpack.c.l.b16 %v23
    %v57 = vunpack.c.l.b16 %v24
    %v58 = vunpack.c.l.b16 %v25
    %v59 = vunpack.c.l.b16 %v26
    %v60 = vunpack.c.l.b16 %v27
    %v61 = vpack.c.b16 %v54, %v53
    %v62 = vpack.c.b16 %v56, %v55
    %v63 = vpack.c.b16 %v58, %v57
    %v64 = vpack.c.b16 %v60, %v59
    %vm69 = vcmask 523264
    %v71 = vsel %vm69, %v43, 0
    %v74 = vsel %vm69, %v44, 0
    %76 = vmatprep.subr.bf16.mxu0 0
    %77 = vmatpush1.bf16.msra.mxu0 %v61
    %78 = vmatprep.subr.bf16.mxu0 0
    %79 = vmatpush1.bf16.msra.mxu0 %v62
    %80 = vmatprep.subr.bf16.mxu0 0
    %81 = vmatpush1.bf16.msra.mxu0 %v63
    %82 = vmatprep.subr.bf16.mxu0 0
    %83 = vmatpush1.bf16.msra.mxu0 %v64
    %84 = vmatprep.subr.bf16.mxu0 0
    %85 = vmatpush1.bf16.msra.mxu0 0
    %86 = vmatprep.subr.bf16.mxu0 0
    %87 = vmatpush1.bf16.msra.mxu0 0
    %88 = vmatprep.subr.bf16.mxu0 0
    %89 = vmatpush1.bf16.msra.mxu0 0
    %90 = vmatprep.subr.bf16.mxu0 0
    %91 = vmatpush1.bf16.msra.mxu0 0
    %92 = vmatprep.subr.bf16.mxu0 0
    %93 = vmatpush1.bf16.msra.mxu0 0
    %94 = vmatprep.subr.bf16.mxu0 0
    %95 = vmatpush1.bf16.msra.mxu0 0
    %96 = vmatprep.subr.bf16.mxu0 0
    %97 = vmatpush1.bf16.msra.mxu0 0
    %98 = vmatprep.subr.bf16.mxu0 0
    %99 = vmatpush1.bf16.msra.mxu0 0
    %100 = vmatprep.subr.bf16.mxu0 0
    %101 = vmatpush1.bf16.msra.mxu0 0
    %102 = vmatprep.subr.bf16.mxu0 0
    %103 = vmatpush1.bf16.msra.mxu0 0
    %104 = vmatprep.subr.bf16.mxu0 0
    %105 = vmatpush1.bf16.msra.mxu0 0
    %106 = vmatprep.subr.bf16.mxu0 0
    %107 = vmatpush1.bf16.msra.mxu0 0
    %108 = vmatprep.mubr.bf16.mxu0 0
    %109 = vmatmul.mubr.bf16.gmra.mrb[0].mxu0 %v71
    %v110 = vpop.f32.mrb[0].mxu0
    %v111 = vadd.f32 %v33, %v110
    %v112 = vpop.f32.mrb[0].mxu0
    %v113 = vpop.f32.mrb[0].mxu0
    %v114 = vadd.f32 %v33, %v113
    %v115 = vpop.f32.mrb[0].mxu0
    %116 = vmatprep.mubr.bf16.mxu0 0
    %117 = vmatmul.mubr.bf16.gmra.mrb[0].mxu0 %v74
    %v118 = vpop.f32.mrb[0].mxu0
    %v119 = vadd.f32 %v33, %v118
    %v120 = vpop.f32.mrb[0].mxu0
    %v121 = vpop.f32.mrb[0].mxu0
    %v122 = vadd.f32 %v33, %v121
    %v123 = vpop.f32.mrb[0].mxu0
    %124 = vdwg.mxu0
    %vm125 = vcmask 261120
    %126 = vst.msk [vmem:[#allocation2] sm:$0xff] %vm125, %v111
    %127 = vst.msk [vmem:[#allocation2 + $0x8] sm:$0xff] %vm125, %v114
    %128 = vst.msk [vmem:[#allocation2 + $0x10] sm:$0xff] %vm125, %v119
    %129 = vst.msk [vmem:[#allocation2 + $0x18] sm:$0xff] %vm125, %v122
    // Predicated region
    $region14: #{patch_embedding_forward.1} parent=1 // pred_check
      _
    $region15: #{patch_embedding_forward.1} parent=1 // pred_check_branch
      %131 = sbr.rel (0) target = $region17
    $region16: #{patch_embedding_forward.1} parent=1 // pred_region
      %s133 = ssub.s32 512, 512
      %134 = vsyncadd [#allocation3], %s133
      %s135 = sshll.u32 [#allocation2], 4
      %s136 = int_to_ptr.vmem [resolvable:$true] %s135
      %141 = dma.vmem_to_hbm [thread:$0]  %s136, 512, %s3, [#allocation3], 128, 128, 8
    $region17: #{patch_embedding_forward.1} parent=1 // pred_fallthru
      _
    // Predicated region
    $region18: #{patch_embedding_forward.1} parent=1 // pred_check
      _
    $region19: #{patch_embedding_forward.1} parent=1 // pred_check_branch
      %143 = sbr.rel (0) target = $region21
    $region20: #{patch_embedding_forward.1} parent=1 // pred_region
      %144 = dma.done [#allocation3], 512
    $region21: #{patch_embedding_forward.1} parent=1 // pred_fallthru
      _
    %145 = vsyncpa [#allocation3], 1

</llo_original>
